<compile_context>
chip_gen: v7x
topology: tpu7x:2x2x1
jax: 0.10.0
libtpu: 0.0.40
codegen_flags: <defaults>
</compile_context>

<pallas_src>
import functools
import math

import jax
import jax.numpy as jnp
import numpy as np
from jax.experimental import pallas as pl
from jax.experimental.pallas import tpu as pltpu

# ---- module hyperparameters (defaults of DirectTemporalNeRFSmall) ----------
NUM_LAYERS = 3
HIDDEN_DIM = 64
GEO_FEAT_DIM = 15
NUM_LAYERS_COLOR = 4
HIDDEN_DIM_COLOR = 64
INPUT_CH = 3
INPUT_CH_VIEWS = 3
INPUT_CH_TIME = 1
ZERO_CANONICAL = True


# ---------------------------------------------------------------------------
# Pallas kernel: fused NeRFSmall forward (sigma net + color net), feature-major
# Inputs are (6, TN) bf16 (features on sublanes, points on lanes); every
# activation is (64|65|128, TN) and fully lane-dense; output block is (4, TN).
# ---------------------------------------------------------------------------
def _nerf_small_kernel(feats_ref, w_in_ref, s1_ref, w_fused_ref,
                       c1_ref, c2_ref, c3_ref, out_ref):
    bf16 = jnp.bfloat16
    f32 = jnp.float32

    feats = feats_ref[...]                                             # (6, TN) bf16

    # One (128,6)@(6,TN) MXU pass:
    #   rows 0..63   = sigma_net[0] @ pts          (needs ReLU)
    #   rows 64..127 = color_net[0][:, :3] @ views (held as-is, NOT ReLU'd)
    h0 = jnp.dot(w_in_ref[...], feats, preferred_element_type=f32)     # (128, TN)
    h_pts = jnp.maximum(h0[:HIDDEN_DIM, :], 0.0).astype(bf16)          # (64, TN)
    views_term = h0[HIDDEN_DIM:, :]                                    # (64, TN) f32

    # sigma_net[1] + ReLU
    h1 = jnp.maximum(jnp.dot(s1_ref[...], h_pts, preferred_element_type=f32),
                     0.0).astype(bf16)                                  # (64, TN)

    # Fused sigma_net[2] / color_net[0]-geo weight:
    #   rows 0..63 = (c0_geo @ s2[1:, :]) @ h1     (geo contribution to color)
    #   row  64    = s2[0, :] @ h1                 (sigma, no nonlinearity)
    t = jnp.dot(w_fused_ref[...], h1, preferred_element_type=f32)       # (65, TN)
    sigma = t[HIDDEN_DIM:HIDDEN_DIM + 1, :]                             # (1, TN) f32

    # color net
    hc = jnp.maximum(views_term + t[:HIDDEN_DIM, :], 0.0).astype(bf16)  # (64, TN)
    hc = jnp.maximum(jnp.dot(c1_ref[...], hc, preferred_element_type=f32), 0.0).astype(bf16)
    hc = jnp.maximum(jnp.dot(c2_ref[...], hc, preferred_element_type=f32), 0.0).astype(bf16)
    color = jnp.dot(c3_ref[...], hc, preferred_element_type=f32)        # (3, TN)

    # lane-dense output: rows 0..2 = color, row 3 = sigma (sublane slices only)
    out_ref[pl.ds(0, 3), :] = color.astype(out_ref.dtype)
    out_ref[pl.ds(3, 1), :] = sigma.astype(out_ref.dtype)


@functools.partial(jax.jit, static_argnames=("tn", "feature_major_out"))
def nerf_small_forward(x, weights, *, tn=8192, feature_major_out=False):
    """x: (N, 6) float32 = [pts(3) | views(3)].

    Returns (N, 4) = [color(3), sigma(1)]  (or (4, N) if feature_major_out).
    weights: packed kernel weights from pack_nerf_small_weights (bf16).
    tn: lane tile (points per grid step); sweep 4096-16384 for your chip.
    NOTE: the tile is derived from N, so each distinct N recompiles — bucket N
    in production to avoid compile churn.
    """
    n = x.shape[0]

    # Lane tile: large to amortize the ~0.35us/step overhead and per-step MXU
    # weight pushes, but capped so there are >=2 grid steps whenever possible
    # (lets the "parallel" axis shard across v7x's two TensorCores).
    two_step_cap = max(128, pl.cdiv(pl.cdiv(n, 2), 128) * 128)
    tn_eff = max(128, min(int(tn), two_step_cap))
    num_blocks = pl.cdiv(n, tn_eff)          # ragged tail handled by Pallas masking

    # Feature-major single input; cast to bf16 BEFORE the transpose so the
    # transpose and the input DMA move half the bytes.
    feats = x.astype(jnp.bfloat16).T                               # (6, N)

    in_specs = [pl.BlockSpec((INPUT_CH + INPUT_CH_VIEWS, tn_eff), lambda i: (0, i))]
    for w in weights:
        in_specs.append(pl.BlockSpec(w.shape, lambda i: (0, 0)))   # resident weights

    macs_per_point = sum(int(w.shape[0]) * int(w.shape[1]) for w in weights)
    bytes_accessed = (
        n * ((INPUT_CH + INPUT_CH_VIEWS) * 2 + 4 * 4)              # bf16 in, f32 out
        + sum(int(w.size) * w.dtype.itemsize for w in weights)
    )

    out_fm = pl.pallas_call(
        _nerf_small_kernel,
        out_shape=jax.ShapeDtypeStruct((4, n), jnp.float32),
        grid_spec=pltpu.PrefetchScalarGridSpec(
            num_scalar_prefetch=0,
            grid=(num_blocks,),
            in_specs=in_specs,
            out_specs=pl.BlockSpec((4, tn_eff), lambda i: (0, i)),
        ),
        compiler_params=pltpu.CompilerParams(
            dimension_semantics=("parallel",),        # no cross-step state
            vmem_limit_bytes=48 * 1024 * 1024,        # fits v7x 64 MiB with headroom
        ),
        cost_estimate=pl.CostEstimate(
            flops=int(2 * macs_per_point * n),
            transcendentals=0,
            bytes_accessed=int(bytes_accessed)),
    )(feats, *weights)

    if feature_major_out:
        return out_fm                                 # (4, N), no output transpose
    return out_fm.T.astype(x.dtype)                   # (N, 4) = [color, sigma]


# ---------------------------------------------------------------------------
# Parameter init (PyTorch nn.Linear layout: (out_dim, in_dim), bias-free)
# ---------------------------------------------------------------------------
def init_nerf_small_params(key):
    shapes = {}
    for l in range(NUM_LAYERS):
        in_dim = INPUT_CH if l == 0 else HIDDEN_DIM
        out_dim = (1 + GEO_FEAT_DIM) if l == NUM_LAYERS - 1 else HIDDEN_DIM
        shapes[f"sigma_{l}"] = (out_dim, in_dim)
    for l in range(NUM_LAYERS_COLOR):
        in_dim = (INPUT_CH_VIEWS + GEO_FEAT_DIM) if l == 0 else HIDDEN_DIM_COLOR
        out_dim = 3 if l == NUM_LAYERS_COLOR - 1 else HIDDEN_DIM_COLOR
        shapes[f"color_{l}"] = (out_dim, in_dim)
    keys = jax.random.split(key, len(shapes))
    params = {}
    for k, (name, (o, i)) in zip(keys, shapes.items()):
        bound = 1.0 / math.sqrt(i)
        params[name] = jax.random.uniform(k, (o, i), dtype=jnp.float32,
                                          minval=-bound, maxval=bound)
    return params


def pack_nerf_small_weights(params, dtype=jnp.bfloat16):
    """Pre-fuse weights (in f32) for the kernel, then cast to bf16.

    Returns (w_in, s1, w_fused, c1, c2, c3):
      w_in    (128, 6): block-diag [sigma_net[0] | color_net[0] views-part]
      s1      (64, 64): sigma_net[1]
      w_fused (65, 64): rows 0..63 = c0_geo @ s2[1:], row 64 = s2[0] (sigma row)
      c1, c2  (64, 64), c3 (3, 64): color_net[1..3]
    """
    s0 = params["sigma_0"].astype(jnp.float32)              # (64, 3)
    s1 = params["sigma_1"].astype(jnp.float32)              # (64, 64)
    s2 = params["sigma_2"].astype(jnp.float32)              # (16, 64) row0=sigma
    c0 = params["color_0"].astype(jnp.float32)              # (64, 18) = [views(3)|geo(15)]

    # Block-diagonal stack: one MXU pass computes sigma_net[0]@pts (rows 0..63)
    # and color_net[0][:, :3]@views (rows 64..127).
    w_in = jnp.zeros((2 * HIDDEN_DIM, INPUT_CH + INPUT_CH_VIEWS), jnp.float32)
    w_in = w_in.at[:HIDDEN_DIM, :INPUT_CH].set(s0)
    w_in = w_in.at[HIDDEN_DIM:, INPUT_CH:].set(c0[:, :INPUT_CH_VIEWS])

    # Algebraic fusion (no nonlinearity between sigma_net output and color_0):
    # c0_geo @ (s2[1:] @ h1) == (c0_geo @ s2[1:]) @ h1.  Computed in f32.
    w_fused = jnp.concatenate(
        [c0[:, INPUT_CH_VIEWS:] @ s2[1:, :], s2[0:1, :]], axis=0)   # (65, 64)

    c1 = params["color_1"]
    c2 = params["color_2"]
    c3 = params["color_3"]
    return tuple(w.astype(dtype) for w in (w_in, s1, w_fused, c1, c2, c3))


# ---------------------------------------------------------------------------
# DirectTemporalNeRFSmall forward (zero-canonical path), jit-friendly
# ---------------------------------------------------------------------------
def check_same_time(ts):
    """One-time host-side check (kept out of the hot path)."""
    t = np.asarray(ts[0])
    assert np.unique(t[:, :1]).shape[0] == 1, "Only accepts all points from same time"
    return float(t[0, 0])


def direct_temporal_nerf_small_forward(weights, x, cur_time, unembedded_pos=None):
    """cur_time is a static Python float (validated once via check_same_time)."""
    input_pts = x[..., :INPUT_CH]
    if cur_time == 0.0 and ZERO_CANONICAL:
        dx = jnp.zeros_like(input_pts[:, :3])
    else:
        # TODO(synk): non-canonical branch needs the externally injected embed_fn
        # (hash encoder) and gumbel-softmax TimeNetClassification / TimeNetRegression;
        # not expressible without those modules.
        raise NotImplementedError("only the zero-canonical (t==0) path is implemented")
    out = nerf_small_forward(x, weights)   # == _occ(cat([input_pts, input_views]))
    return out, dx


# ---------------------------------------------------------------------------
# Pure-JAX f32 reference (mirrors the PyTorch math) for the correctness check
# ---------------------------------------------------------------------------
def _nerf_small_ref(x, params):
    pts = x[:, :INPUT_CH]
    views = x[:, INPUT_CH:INPUT_CH + INPUT_CH_VIEWS]
    h = pts
    for l in range(NUM_LAYERS):
        h = h @ params[f"sigma_{l}"].T
        if l != NUM_LAYERS - 1:
            h = jnp.maximum(h, 0.0)
    sigma, geo = h[:, :1], h[:, 1:]
    h = jnp.concatenate([views, geo], axis=-1)
    for l in range(NUM_LAYERS_COLOR):
        h = h @ params[f"color_{l}"].T
        if l != NUM_LAYERS_COLOR - 1:
            h = jnp.maximum(h, 0.0)
    return jnp.concatenate([h, sigma], axis=-1)


if __name__ == "__main__":
    key = jax.random.PRNGKey(0)
    k_param, k_x, k_pos = jax.random.split(key, 3)

    # N deliberately NOT a multiple of 128 to exercise the ragged-tail masking.
    N = 500
    params = init_nerf_small_params(k_param)             # f32, PyTorch layout
    weights = pack_nerf_small_weights(params)             # bf16, fused kernel layout

    x = jax.random.normal(k_x, (N, INPUT_CH + INPUT_CH_VIEWS), dtype=jnp.float32)
    ts = jnp.zeros((1, N, INPUT_CH_TIME), dtype=jnp.float32)   # all points at time 0
    unembedded_pos = jax.random.normal(k_pos, (N, 3), dtype=jnp.float32)

    cur_time = check_same_time(ts)   # host-side, once, outside the hot path
    out, dx = direct_temporal_nerf_small_forward(weights, x, cur_time, unembedded_pos)
    out, dx = jax.block_until_ready((out, dx))

    # correctness vs f32 reference; tolerance relaxed for the bf16 matmul chain
    ref = _nerf_small_ref(x, params)
    np.testing.assert_allclose(np.asarray(out), np.asarray(ref), rtol=3e-2, atol=3e-2)
    assert out.shape == (N, 4) and dx.shape == (N, 3)
    assert float(jnp.abs(dx).max()) == 0.0

    print("KERNEL_OK")
</pallas_src>

<mosaic_0001>
module attributes {stable_mosaic.version = 11 : i64} {
  func.func @_nerf_small_kernel(%arg0: i32, %arg1: memref<6x256xbf16, #tpu.memory_space<vmem>>, %arg2: memref<128x6xbf16, #tpu.memory_space<vmem>>, %arg3: memref<64x64xbf16, #tpu.memory_space<vmem>>, %arg4: memref<65x64xbf16, #tpu.memory_space<vmem>>, %arg5: memref<64x64xbf16, #tpu.memory_space<vmem>>, %arg6: memref<64x64xbf16, #tpu.memory_space<vmem>>, %arg7: memref<3x64xbf16, #tpu.memory_space<vmem>>, %arg8: memref<4x256xf32, #tpu.memory_space<vmem>>) attributes {dimension_semantics = [#tpu.dimension_semantics<parallel>], iteration_bounds = array<i64: 2>, scalar_prefetch = 0 : i64, scratch_operands = 0 : i64, tpu.core_type = #tpu.core_type<tc>, window_params = [{transform_indices = @transform_0, window_bounds = array<i64: 6, 256>}, {pipeline_mode = #tpu.pipeline_mode<synchronous>, transform_indices = @transform_1, window_bounds = array<i64: 128, 6>}, {pipeline_mode = #tpu.pipeline_mode<synchronous>, transform_indices = @transform_2, window_bounds = array<i64: 64, 64>}, {pipeline_mode = #tpu.pipeline_mode<synchronous>, transform_indices = @transform_3, window_bounds = array<i64: 65, 64>}, {pipeline_mode = #tpu.pipeline_mode<synchronous>, transform_indices = @transform_4, window_bounds = array<i64: 64, 64>}, {pipeline_mode = #tpu.pipeline_mode<synchronous>, transform_indices = @transform_5, window_bounds = array<i64: 64, 64>}, {pipeline_mode = #tpu.pipeline_mode<synchronous>, transform_indices = @transform_6, window_bounds = array<i64: 3, 64>}, {transform_indices = @transform_7, window_bounds = array<i64: 4, 256>}]} {
    %c0 = arith.constant 0 : index
    %c0_0 = arith.constant 0 : index
    %0 = vector.load %arg1[%c0, %c0_0] : memref<6x256xbf16, #tpu.memory_space<vmem>>, vector<6x256xbf16>
    %c0_1 = arith.constant 0 : index
    %c0_2 = arith.constant 0 : index
    %1 = vector.load %arg2[%c0_1, %c0_2] : memref<128x6xbf16, #tpu.memory_space<vmem>>, vector<128x6xbf16>
    %cst = arith.constant dense<0.000000e+00> : vector<128x256xf32>
    %2 = tpu.matmul %1, %0, %cst {dimension_numbers = #tpu.dot_dimension_numbers<[1], [0], [0], [1], [0, 0, 1, 1], [], []>} : vector<128x6xbf16>, vector<6x256xbf16>, vector<128x256xf32> -> vector<128x256xf32>
    %3 = vector.extract_strided_slice %2 {offsets = [0, 0], sizes = [64, 256], strides = [1, 1]} : vector<128x256xf32> to vector<64x256xf32>
    %cst_3 = arith.constant 0.000000e+00 : f32
    %4 = vector.broadcast %cst_3 : f32 to vector<64x256xf32>
    %5 = arith.maximumf %3, %4 : vector<64x256xf32>
    %6 = arith.truncf %5 : vector<64x256xf32> to vector<64x256xbf16>
    %7 = vector.extract_strided_slice %2 {offsets = [64, 0], sizes = [64, 256], strides = [1, 1]} : vector<128x256xf32> to vector<64x256xf32>
    %c0_4 = arith.constant 0 : index
    %c0_5 = arith.constant 0 : index
    %8 = vector.load %arg3[%c0_4, %c0_5] : memref<64x64xbf16, #tpu.memory_space<vmem>>, vector<64x64xbf16>
    %cst_6 = arith.constant dense<0.000000e+00> : vector<64x256xf32>
    %9 = tpu.matmul %8, %6, %cst_6 {dimension_numbers = #tpu.dot_dimension_numbers<[1], [0], [0], [1], [0, 0, 1, 1], [], []>} : vector<64x64xbf16>, vector<64x256xbf16>, vector<64x256xf32> -> vector<64x256xf32>
    %cst_7 = arith.constant 0.000000e+00 : f32
    %10 = vector.broadcast %cst_7 : f32 to vector<64x256xf32>
    %11 = arith.maximumf %9, %10 : vector<64x256xf32>
    %12 = arith.truncf %11 : vector<64x256xf32> to vector<64x256xbf16>
    %c0_8 = arith.constant 0 : index
    %c0_9 = arith.constant 0 : index
    %13 = vector.load %arg4[%c0_8, %c0_9] : memref<65x64xbf16, #tpu.memory_space<vmem>>, vector<65x64xbf16>
    %cst_10 = arith.constant dense<0.000000e+00> : vector<65x256xf32>
    %14 = tpu.matmul %13, %12, %cst_10 {dimension_numbers = #tpu.dot_dimension_numbers<[1], [0], [0], [1], [0, 0, 1, 1], [], []>} : vector<65x64xbf16>, vector<64x256xbf16>, vector<65x256xf32> -> vector<65x256xf32>
    %15 = vector.extract_strided_slice %14 {offsets = [64, 0], sizes = [1, 256], strides = [1, 1]} : vector<65x256xf32> to vector<1x256xf32>
    %16 = vector.extract_strided_slice %14 {offsets = [0, 0], sizes = [64, 256], strides = [1, 1]} : vector<65x256xf32> to vector<64x256xf32>
    %17 = arith.addf %7, %16 : vector<64x256xf32>
    %cst_11 = arith.constant 0.000000e+00 : f32
    %18 = vector.broadcast %cst_11 : f32 to vector<64x256xf32>
    %19 = arith.maximumf %17, %18 : vector<64x256xf32>
    %20 = arith.truncf %19 : vector<64x256xf32> to vector<64x256xbf16>
    %c0_12 = arith.constant 0 : index
    %c0_13 = arith.constant 0 : index
    %21 = vector.load %arg5[%c0_12, %c0_13] : memref<64x64xbf16, #tpu.memory_space<vmem>>, vector<64x64xbf16>
    %cst_14 = arith.constant dense<0.000000e+00> : vector<64x256xf32>
    %22 = tpu.matmul %21, %20, %cst_14 {dimension_numbers = #tpu.dot_dimension_numbers<[1], [0], [0], [1], [0, 0, 1, 1], [], []>} : vector<64x64xbf16>, vector<64x256xbf16>, vector<64x256xf32> -> vector<64x256xf32>
    %cst_15 = arith.constant 0.000000e+00 : f32
    %23 = vector.broadcast %cst_15 : f32 to vector<64x256xf32>
    %24 = arith.maximumf %22, %23 : vector<64x256xf32>
    %25 = arith.truncf %24 : vector<64x256xf32> to vector<64x256xbf16>
    %c0_16 = arith.constant 0 : index
    %c0_17 = arith.constant 0 : index
    %26 = vector.load %arg6[%c0_16, %c0_17] : memref<64x64xbf16, #tpu.memory_space<vmem>>, vector<64x64xbf16>
    %cst_18 = arith.constant dense<0.000000e+00> : vector<64x256xf32>
    %27 = tpu.matmul %26, %25, %cst_18 {dimension_numbers = #tpu.dot_dimension_numbers<[1], [0], [0], [1], [0, 0, 1, 1], [], []>} : vector<64x64xbf16>, vector<64x256xbf16>, vector<64x256xf32> -> vector<64x256xf32>
    %cst_19 = arith.constant 0.000000e+00 : f32
    %28 = vector.broadcast %cst_19 : f32 to vector<64x256xf32>
    %29 = arith.maximumf %27, %28 : vector<64x256xf32>
    %30 = arith.truncf %29 : vector<64x256xf32> to vector<64x256xbf16>
    %c0_20 = arith.constant 0 : index
    %c0_21 = arith.constant 0 : index
    %31 = vector.load %arg7[%c0_20, %c0_21] : memref<3x64xbf16, #tpu.memory_space<vmem>>, vector<3x64xbf16>
    %cst_22 = arith.constant dense<0.000000e+00> : vector<3x256xf32>
    %32 = tpu.matmul %31, %30, %cst_22 {dimension_numbers = #tpu.dot_dimension_numbers<[1], [0], [0], [1], [0, 0, 1, 1], [], []>} : vector<3x64xbf16>, vector<64x256xbf16>, vector<3x256xf32> -> vector<3x256xf32>
    %c0_23 = arith.constant 0 : index
    %c0_24 = arith.constant 0 : index
    %33 = vector.load %arg8[%c0_23, %c0_24] : memref<4x256xf32, #tpu.memory_space<vmem>>, vector<3x256xf32>
    tpu.vector_store %arg8[%c0_23, %c0_24], %32 {strides = array<i32>} : memref<4x256xf32, #tpu.memory_space<vmem>>, vector<3x256xf32>,
    %c3 = arith.constant 3 : index
    %c0_25 = arith.constant 0 : index
    %34 = vector.load %arg8[%c3, %c0_25] : memref<4x256xf32, #tpu.memory_space<vmem>>, vector<1x256xf32>
    tpu.vector_store %arg8[%c3, %c0_25], %15 {strides = array<i32>} : memref<4x256xf32, #tpu.memory_space<vmem>>, vector<1x256xf32>,
    return
  }
  func.func @transform_0(%arg0: i32) -> (i32, i32) {
    %c0_i32 = arith.constant 0 : i32
    %c0_i32_0 = arith.constant 0 : i32
    return %c0_i32, %arg0 : i32, i32
  }
  func.func @transform_1(%arg0: i32) -> (i32, i32) {
    %c0_i32 = arith.constant 0 : i32
    %c0_i32_0 = arith.constant 0 : i32
    %c0_i32_1 = arith.constant 0 : i32
    return %c0_i32, %c0_i32_0 : i32, i32
  }
  func.func @transform_2(%arg0: i32) -> (i32, i32) {
    %c0_i32 = arith.constant 0 : i32
    %c0_i32_0 = arith.constant 0 : i32
    %c0_i32_1 = arith.constant 0 : i32
    return %c0_i32, %c0_i32_0 : i32, i32
  }
  func.func @transform_3(%arg0: i32) -> (i32, i32) {
    %c0_i32 = arith.constant 0 : i32
    %c0_i32_0 = arith.constant 0 : i32
    %c0_i32_1 = arith.constant 0 : i32
    return %c0_i32, %c0_i32_0 : i32, i32
  }
  func.func @transform_4(%arg0: i32) -> (i32, i32) {
    %c0_i32 = arith.constant 0 : i32
    %c0_i32_0 = arith.constant 0 : i32
    %c0_i32_1 = arith.constant 0 : i32
    return %c0_i32, %c0_i32_0 : i32, i32
  }
  func.func @transform_5(%arg0: i32) -> (i32, i32) {
    %c0_i32 = arith.constant 0 : i32
    %c0_i32_0 = arith.constant 0 : i32
    %c0_i32_1 = arith.constant 0 : i32
    return %c0_i32, %c0_i32_0 : i32, i32
  }
  func.func @transform_6(%arg0: i32) -> (i32, i32) {
    %c0_i32 = arith.constant 0 : i32
    %c0_i32_0 = arith.constant 0 : i32
    %c0_i32_1 = arith.constant 0 : i32
    return %c0_i32, %c0_i32_0 : i32, i32
  }
  func.func @transform_7(%arg0: i32) -> (i32, i32) {
    %c0_i32 = arith.constant 0 : i32
    %c0_i32_0 = arith.constant 0 : i32
    return %c0_i32, %arg0 : i32, i32
  }
}

</mosaic_0001>

<llo_original>
// kernel: nerf_small_forward.1
$region0: #{nerf_small_forward.1}
  #allocation0 [shape = 'u32[]', space=smem, size = 0x4, offset = 0x4, fixed_abs, tag = 'smem constant byte address 0x4 - core index']
  #allocation1 [shape = 'u32[144,128]{1,0:T(1,128)}', space=vmem, size = 0x12000, scoped, tag = 'internal scratch']
  %s0 = inlined_call_operand.vmem [shape: bf16[6,500], index: 0, kind: input, shape index: {}]
  %s1 = inlined_call_operand.vmem [shape: bf16[128,6], index: 1, kind: input, shape index: {}]
  %s2 = inlined_call_operand.vmem [shape: bf16[64,64], index: 2, kind: input, shape index: {}]
  %s3 = inlined_call_operand.vmem [shape: bf16[65,64], index: 3, kind: input, shape index: {}]
  %s4 = inlined_call_operand.vmem [shape: bf16[64,64], index: 4, kind: input, shape index: {}]
  %s5 = inlined_call_operand.vmem [shape: bf16[64,64], index: 5, kind: input, shape index: {}]
  %s6 = inlined_call_operand.vmem [shape: bf16[3,64], index: 6, kind: input, shape index: {}]
  %s7 = inlined_call_operand.hbm [shape: f32[4,500], index: 7, kind: output, shape index: {}]
  %s8 = sld [smem:[#allocation0]]
  $region61: #{nerf_small_forward.1} parent=0
    _
  %s10 = ssub.s32 1, %s8
  %s11 = scalar_select 0, %s10, %s8
  $region1: #{nerf_small_forward.1} parent=0
    #allocation2 [shape = 'u8[8192]{0}', space=vmem, size = 0x2000, scoped, tag = 'output window, operand 0']
    #allocation3 [shape = 's32[2]{0}', space=sflag, size = 0x8, scoped, tag = 'scoped memory for nerf_small_forward.1']
    %12 = vsyncpa [#allocation3], 0
    %s13 = scalar_lea.sflag [#allocation3], 1
    %14 = vsyncpa %s13, 0
    loop: start=0, step=1, limit=4
    $region2: #{nerf_small_forward.1} parent=1 // loop_pre_header
      _
    $region3: #{nerf_small_forward.1} parent=1 // loop_header
      %s16 = sphi 0, %s20
      %p17 = scmp.ge.s32.totalorder %s16, 4
      %s26 = sphi 0, %s28
      %s29 = sphi 0, %s26
      %s30 = sphi 0, %s29
      %s46 = sphi 0, %s30
      %s50 = sphi 0, %s50
      %s52 = sphi 0, %s50
      %s53 = sphi 0, %s52
      %s67 = sphi 0, %s53
      %s71 = sphi 0, %s71
      %s73 = sphi 0, %s71
      %s74 = sphi 0, %s73
      %s88 = sphi 0, %s74
      %s92 = sphi 0, %s92
      %s94 = sphi 0, %s92
      %s95 = sphi 0, %s94
      %s109 = sphi 0, %s95
      %s113 = sphi 0, %s113
      %s115 = sphi 0, %s113
      %s116 = sphi 0, %s115
      %s130 = sphi 0, %s116
      %s134 = sphi 0, %s134
      %s136 = sphi 0, %s134
      %s137 = sphi 0, %s136
      %s151 = sphi 0, %s137
      %s155 = sphi 0, %s155
      %s157 = sphi 0, %s155
      %s158 = sphi 0, %s157
      %s172 = sphi 0, %s158
      %s178 = sphi 0, %s180
      %s181 = sphi 0, %s178
      %s182 = sphi 0, %s181
      %s198 = sphi 0, %s182
    $region4: #{nerf_small_forward.1} parent=1 // loop_header_branch
      %19 = sbr.rel (%p17) target = $region8
    $region5: #{nerf_small_forward.1} parent=1 // loop_body
      %s21 = ssub.s32 %s16, 1
      %s22 = ssub.s32 %s16, 2
      %s23 = sadd.s32 %s16, 1
      %s24 = ssub.s32 %s16, %s23
      %p25 = scmp.eq.s32.totalorder %s24, 0
      %s27 = sadd.s32 %s26, 1
      %s28 = scalar_select %p25, %s26, %s27
      %p31 = pneg %p25
      %p32 = scmp.eq.s32.totalorder %s16, 1
      %p33 = por %p31, %p32
      %p34 = scmp.ne.s32.totalorder %s26, %s29
      %p35 = scmp.eq.s32.totalorder %s16, 0
      %p36 = por %p34, %p35
      %p37 = scmp.ne.s32.totalorder %s26, %s29
      %p38 = scmp.eq.s32.totalorder %s21, 1
      %p39 = por %p37, %p38
      %p40 = scmp.ne.s32.totalorder %s29, %s30
      %p41 = scmp.eq.s32.totalorder %s21, 0
      %p42 = por %p40, %p41
      %p43 = scmp.ne.s32.totalorder %s29, %s30
      %p44 = scmp.eq.s32.totalorder %s22, 1
      %p45 = por %p43, %p44
      %p47 = scmp.ne.s32.totalorder %s30, %s46
      %p48 = scmp.eq.s32.totalorder %s22, 0
      %p49 = por %p47, %p48
      %s51 = sadd.s32 %s50, 1
      %p54 = scmp.eq.s32.totalorder %s16, 1
      %p55 = scmp.ne.s32.totalorder %s50, %s52
      %p56 = scmp.eq.s32.totalorder %s16, 0
      %p57 = por %p55, %p56
      %p58 = scmp.ne.s32.totalorder %s50, %s52
      %p59 = scmp.eq.s32.totalorder %s21, 1
      %p60 = por %p58, %p59
      %p61 = scmp.ne.s32.totalorder %s52, %s53
      %p62 = scmp.eq.s32.totalorder %s21, 0
      %p63 = por %p61, %p62
      %p64 = scmp.ne.s32.totalorder %s52, %s53
      %p65 = scmp.eq.s32.totalorder %s22, 1
      %p66 = por %p64, %p65
      %p68 = scmp.ne.s32.totalorder %s53, %s67
      %p69 = scmp.eq.s32.totalorder %s22, 0
      %p70 = por %p68, %p69
      %s72 = sadd.s32 %s71, 1
      %p75 = scmp.eq.s32.totalorder %s16, 1
      %p76 = scmp.ne.s32.totalorder %s71, %s73
      %p77 = scmp.eq.s32.totalorder %s16, 0
      %p78 = por %p76, %p77
      %p79 = scmp.ne.s32.totalorder %s71, %s73
      %p80 = scmp.eq.s32.totalorder %s21, 1
      %p81 = por %p79, %p80
      %p82 = scmp.ne.s32.totalorder %s73, %s74
      %p83 = scmp.eq.s32.totalorder %s21, 0
      %p84 = por %p82, %p83
      %p85 = scmp.ne.s32.totalorder %s73, %s74
      %p86 = scmp.eq.s32.totalorder %s22, 1
      %p87 = por %p85, %p86
      %p89 = scmp.ne.s32.totalorder %s74, %s88
      %p90 = scmp.eq.s32.totalorder %s22, 0
      %p91 = por %p89, %p90
      %s93 = sadd.s32 %s92, 1
      %p96 = scmp.eq.s32.totalorder %s16, 1
      %p97 = scmp.ne.s32.totalorder %s92, %s94
      %p98 = scmp.eq.s32.totalorder %s16, 0
      %p99 = por %p97, %p98
      %p100 = scmp.ne.s32.totalorder %s92, %s94
      %p101 = scmp.eq.s32.totalorder %s21, 1
      %p102 = por %p100, %p101
      %p103 = scmp.ne.s32.totalorder %s94, %s95
      %p104 = scmp.eq.s32.totalorder %s21, 0
      %p105 = por %p103, %p104
      %p106 = scmp.ne.s32.totalorder %s94, %s95
      %p107 = scmp.eq.s32.totalorder %s22, 1
      %p108 = por %p106, %p107
      %p110 = scmp.ne.s32.totalorder %s95, %s109
      %p111 = scmp.eq.s32.totalorder %s22, 0
      %p112 = por %p110, %p111
      %s114 = sadd.s32 %s113, 1
      %p117 = scmp.eq.s32.totalorder %s16, 1
      %p118 = scmp.ne.s32.totalorder %s113, %s115
      %p119 = scmp.eq.s32.totalorder %s16, 0
      %p120 = por %p118, %p119
      %p121 = scmp.ne.s32.totalorder %s113, %s115
      %p122 = scmp.eq.s32.totalorder %s21, 1
      %p123 = por %p121, %p122
      %p124 = scmp.ne.s32.totalorder %s115, %s116
      %p125 = scmp.eq.s32.totalorder %s21, 0
      %p126 = por %p124, %p125
      %p127 = scmp.ne.s32.totalorder %s115, %s116
      %p128 = scmp.eq.s32.totalorder %s22, 1
      %p129 = por %p127, %p128
      %p131 = scmp.ne.s32.totalorder %s116, %s130
      %p132 = scmp.eq.s32.totalorder %s22, 0
      %p133 = por %p131, %p132
      %s135 = sadd.s32 %s134, 1
      %p138 = scmp.eq.s32.totalorder %s16, 1
      %p139 = scmp.ne.s32.totalorder %s134, %s136
      %p140 = scmp.eq.s32.totalorder %s16, 0
      %p141 = por %p139, %p140
      %p142 = scmp.ne.s32.totalorder %s134, %s136
      %p143 = scmp.eq.s32.totalorder %s21, 1
      %p144 = por %p142, %p143
      %p145 = scmp.ne.s32.totalorder %s136, %s137
      %p146 = scmp.eq.s32.totalorder %s21, 0
      %p147 = por %p145, %p146
      %p148 = scmp.ne.s32.totalorder %s136, %s137
      %p149 = scmp.eq.s32.totalorder %s22, 1
      %p150 = por %p148, %p149
      %p152 = scmp.ne.s32.totalorder %s137, %s151
      %p153 = scmp.eq.s32.totalorder %s22, 0
      %p154 = por %p152, %p153
      %s156 = sadd.s32 %s155, 1
      %p159 = scmp.eq.s32.totalorder %s16, 1
      %p160 = scmp.ne.s32.totalorder %s155, %s157
      %p161 = scmp.eq.s32.totalorder %s16, 0
      %p162 = por %p160, %p161
      %p163 = scmp.ne.s32.totalorder %s155, %s157
      %p164 = scmp.eq.s32.totalorder %s21, 1
      %p165 = por %p163, %p164
      %p166 = scmp.ne.s32.totalorder %s157, %s158
      %p167 = scmp.eq.s32.totalorder %s21, 0
      %p168 = por %p166, %p167
      %p169 = scmp.ne.s32.totalorder %s157, %s158
      %p170 = scmp.eq.s32.totalorder %s22, 1
      %p171 = por %p169, %p170
      %p173 = scmp.ne.s32.totalorder %s158, %s172
      %p174 = scmp.eq.s32.totalorder %s22, 0
      %p175 = por %p173, %p174
      %s176 = ssub.s32 %s16, %s23
      %p177 = scmp.eq.s32.totalorder %s176, 0
      %s179 = sadd.s32 %s178, 1
      %s180 = scalar_select %p177, %s178, %s179
      %p183 = pneg %p177
      %p184 = scmp.eq.s32.totalorder %s16, 1
      %p185 = por %p183, %p184
      %p186 = scmp.ne.s32.totalorder %s178, %s181
      %p187 = scmp.eq.s32.totalorder %s16, 0
      %p188 = por %p186, %p187
      %p189 = scmp.ne.s32.totalorder %s178, %s181
      %p190 = scmp.eq.s32.totalorder %s21, 1
      %p191 = por %p189, %p190
      %p192 = scmp.ne.s32.totalorder %s181, %s182
      %p193 = scmp.eq.s32.totalorder %s21, 0
      %p194 = por %p192, %p193
      %p195 = scmp.ne.s32.totalorder %s181, %s182
      %p196 = scmp.eq.s32.totalorder %s22, 1
      %p197 = por %p195, %p196
      %p199 = scmp.ne.s32.totalorder %s182, %s198
      %p200 = scmp.eq.s32.totalorder %s22, 0
      %p201 = por %p199, %p200
      %p202 = scmp.le.s32.totalorder 1, %s16
      %p203 = scmp.lt.s32.totalorder %s16, 3
      %p204 = pnand %p202, %p203
      %p205 = pneg %p204
      // Predicated region
      $region9: #{nerf_small_forward.1} parent=5 // pred_check
        _
      $region10: #{nerf_small_forward.1} parent=5 // pred_check_branch
        %207 = sbr.rel (%p204) target = $region12
      $region11: #{nerf_small_forward.1} parent=5 // pred_region
        %s208 = ssub.s32 %s16, 1
        // Predicated region
        $region13: #{nerf_small_forward.1} parent=11 // pred_check
          %p209 = pneg %p63
        $region14: #{nerf_small_forward.1} parent=11 // pred_check_branch
          %211 = sbr.rel (%p209) target = $region16
        $region15: #{nerf_small_forward.1} parent=11 // pred_region
          _
        $region16: #{nerf_small_forward.1} parent=11 // pred_fallthru
          _
        // Predicated region
        $region17: #{nerf_small_forward.1} parent=11 // pred_check
          %p212 = pneg %p84
        $region18: #{nerf_small_forward.1} parent=11 // pred_check_branch
          %214 = sbr.rel (%p212) target = $region20
        $region19: #{nerf_small_forward.1} parent=11 // pred_region
          _
        $region20: #{nerf_small_forward.1} parent=11 // pred_fallthru
          _
        // Predicated region
        $region21: #{nerf_small_forward.1} parent=11 // pred_check
          %p215 = pneg %p105
        $region22: #{nerf_small_forward.1} parent=11 // pred_check_branch
          %217 = sbr.rel (%p215) target = $region24
        $region23: #{nerf_small_forward.1} parent=11 // pred_region
          _
        $region24: #{nerf_small_forward.1} parent=11 // pred_fallthru
          _
        // Predicated region
        $region25: #{nerf_small_forward.1} parent=11 // pred_check
          %p218 = pneg %p126
        $region26: #{nerf_small_forward.1} parent=11 // pred_check_branch
          %220 = sbr.rel (%p218) target = $region28
        $region27: #{nerf_small_forward.1} parent=11 // pred_region
          _
        $region28: #{nerf_small_forward.1} parent=11 // pred_fallthru
          _
        // Predicated region
        $region29: #{nerf_small_forward.1} parent=11 // pred_check
          %p221 = pneg %p147
        $region30: #{nerf_small_forward.1} parent=11 // pred_check_branch
          %223 = sbr.rel (%p221) target = $region32
        $region31: #{nerf_small_forward.1} parent=11 // pred_region
          _
        $region32: #{nerf_small_forward.1} parent=11 // pred_fallthru
          _
        // Predicated region
        $region33: #{nerf_small_forward.1} parent=11 // pred_check
          %p224 = pneg %p168
        $region34: #{nerf_small_forward.1} parent=11 // pred_check_branch
          %226 = sbr.rel (%p224) target = $region36
        $region35: #{nerf_small_forward.1} parent=11 // pred_region
          _
        $region36: #{nerf_small_forward.1} parent=11 // pred_fallthru
          _
      $region12: #{nerf_small_forward.1} parent=5 // pred_fallthru
        _
      %p227 = scmp.lt.s32.totalorder %s16, 2
      // Predicated region
      $region37: #{nerf_small_forward.1} parent=5 // pred_check
        %p228 = pneg %p227
      $region38: #{nerf_small_forward.1} parent=5 // pred_check_branch
        %230 = sbr.rel (%p228) target = $region40
      $region39: #{nerf_small_forward.1} parent=5 // pred_region
        // Predicated region
        $region41: #{nerf_small_forward.1} parent=39 // pred_check
          %p231 = pneg %p36
        $region42: #{nerf_small_forward.1} parent=39 // pred_check_branch
          %233 = sbr.rel (%p231) target = $region44
        $region43: #{nerf_small_forward.1} parent=39 // pred_region
          %s234 = smul.u32 2, %s16
          %p235 = scmp.lt.s32.totalorder %s234, 3
          %s236 = scalar_select %p235, %s234, 3
          %s237 = smul.addr %s236, 4
          %s238 = scalar_lea.vmem %s0, %s237
          %s239 = smul.u32 2, %s16
        $region44: #{nerf_small_forward.1} parent=39 // pred_fallthru
          _
      $region40: #{nerf_small_forward.1} parent=5 // pred_fallthru
        _
      %p240 = scmp.le.s32.totalorder 1, %s16
      %p241 = scmp.lt.s32.totalorder %s16, 3
      %p242 = pnand %p240, %p241
      %p243 = pneg %p242
      // Predicated region
      $region45: #{nerf_small_forward.1} parent=5 // pred_check
        _
      $region46: #{nerf_small_forward.1} parent=5 // pred_check_branch
        %245 = sbr.rel (%p242) target = $region48
      $region47: #{nerf_small_forward.1} parent=5 // pred_region
        %s246 = ssub.s32 %s16, 1
        %s247 = smul.u32 2, %s21
        %p248 = scmp.lt.s32.totalorder %s247, 3
        %s249 = scalar_select %p248, %s247, 3
        %s250 = smul.addr %s249, 4
        %s251 = scalar_lea.vmem %s0, %s250
        %p252 = pneg %p42
        %p253 = pneg %p39
        %p254 = pneg %p63
        %p255 = pneg %p60
        %p256 = pneg %p84
        %p257 = pneg %p81
        %p258 = pneg %p105
        %p259 = pneg %p102
        %p260 = pneg %p126
        %p261 = pneg %p123
        %p262 = pneg %p147
        %p263 = pneg %p144
        %p264 = pneg %p168
        %p265 = pneg %p165
        %p266 = pneg %p194
        %p267 = pneg %p191
        %s268 = sand.u32 %s181, 1
        %s269 = scalar_lea.sflag [#allocation3], %s268
        %s270 = sand.u32 %s181, 1
        %s271 = smul.addr %s270, 8
        %s272 = scalar_lea.vmem [#allocation2], %s271
        %s273 = smul.u32 2, %s21
        %p274 = scmp.lt.s32.totalorder %s273, 3
        %s275 = scalar_select %p274, %s273, 3
        %s276 = smul.addr %s275, 4
        %s277 = scalar_lea.vmem %s0, %s276
        %s278 = smul.u32 2, %s21
        %s279 = smul.u32 2, %s21
        %v281 = vld [vmem:[%s277] sm:$0x77]
        %v282 = vld [vmem:[%s1] sm:$0xf]
        %v283 = vld [vmem:[%s1 + $0x4] sm:$0xf]
        %v284 = vld [vmem:[%s1 + $0x8] sm:$0xf]
        %v285 = vld [vmem:[%s1 + $0xc] sm:$0xf]
        %v286 = vld [vmem:[%s1 + $0x10] sm:$0xf]
        %v287 = vld [vmem:[%s1 + $0x14] sm:$0xf]
        %v288 = vld [vmem:[%s1 + $0x18] sm:$0xf]
        %v289 = vld [vmem:[%s1 + $0x1c] sm:$0xf]
        %v290 = vld [vmem:[%s1 + $0x20] sm:$0xf]
        %v291 = vld [vmem:[%s1 + $0x24] sm:$0xf]
        %v292 = vld [vmem:[%s1 + $0x28] sm:$0xf]
        %v293 = vld [vmem:[%s1 + $0x2c] sm:$0xf]
        %v294 = vld [vmem:[%s1 + $0x30] sm:$0xf]
        %v295 = vld [vmem:[%s1 + $0x34] sm:$0xf]
        %v296 = vld [vmem:[%s1 + $0x38] sm:$0xf]
        %v297 = vld [vmem:[%s1 + $0x3c] sm:$0xf]
        %v314 = vunpack.c.l.b16 %v282
        %v315 = vunpack.c.l.b16 %v283
        %v316 = vunpack.c.l.b16 %v284
        %v317 = vunpack.c.l.b16 %v285
        %v318 = vunpack.c.l.b16 %v286
        %v319 = vunpack.c.l.b16 %v287
        %v320 = vunpack.c.l.b16 %v288
        %v321 = vunpack.c.l.b16 %v289
        %v322 = vunpack.c.l.b16 %v290
        %v323 = vunpack.c.l.b16 %v291
        %v324 = vunpack.c.l.b16 %v292
        %v325 = vunpack.c.l.b16 %v293
        %v326 = vunpack.c.l.b16 %v294
        %v327 = vunpack.c.l.b16 %v295
        %v328 = vunpack.c.l.b16 %v296
        %v329 = vunpack.c.l.b16 %v297
        %v330 = vpack.c.b16 %v315, %v314
        %v331 = vpack.c.b16 %v317, %v316
        %v332 = vpack.c.b16 %v319, %v318
        %v333 = vpack.c.b16 %v321, %v320
        %v334 = vpack.c.b16 %v323, %v322
        %v335 = vpack.c.b16 %v325, %v324
        %v336 = vpack.c.b16 %v327, %v326
        %v337 = vpack.c.b16 %v329, %v328
        %v339 = vunpack.c.l.b16 %v281
        %v340 = vunpack.c.h.b16 %v281
        %v341 = vpack.c.b16 %v339, %v339
        %v342 = vpack.c.b16 %v340, %v340
        %vm343 = vcmask 48128
        %v345 = vsel %vm343, %v330, 0
        %v348 = vsel %vm343, %v331, 0
        %v351 = vsel %vm343, %v332, 0
        %v354 = vsel %vm343, %v333, 0
        %v357 = vsel %vm343, %v334, 0
        %v360 = vsel %vm343, %v335, 0
        %v363 = vsel %vm343, %v336, 0
        %v366 = vsel %vm343, %v337, 0
        %vm368 = vcmask 1042432
        %v370 = vsel %vm368, %v341, 0
        %v373 = vsel %vm368, %v342, 0
        %375 = vmatprep.subr.bf16.mxu0 %v373
        %376 = vmatpush1.bf16.msra.mxu0 %v370
        %377 = vmatprep.subr.bf16.mxu0 0
        %378 = vmatpush1.bf16.msra.mxu0 0
        %379 = vmatprep.subr.bf16.mxu0 0
        %380 = vmatpush1.bf16.msra.mxu0 0
        %381 = vmatprep.subr.bf16.mxu0 0
        %382 = vmatpush1.bf16.msra.mxu0 0
        %383 = vmatprep.subr.bf16.mxu0 0
        %384 = vmatpush1.bf16.msra.mxu0 0
        %385 = vmatprep.subr.bf16.mxu0 0
        %386 = vmatpush1.bf16.msra.mxu0 0
        %387 = vmatprep.subr.bf16.mxu0 0
        %388 = vmatpush1.bf16.msra.mxu0 0
        %389 = vmatprep.subr.bf16.mxu0 0
        %390 = vmatpush1.bf16.msra.mxu0 0
        %391 = vmatprep.subr.bf16.mxu0 0
        %392 = vmatpush1.bf16.msra.mxu0 0
        %393 = vmatprep.subr.bf16.mxu0 0
        %394 = vmatpush1.bf16.msra.mxu0 0
        %395 = vmatprep.subr.bf16.mxu0 0
        %396 = vmatpush1.bf16.msra.mxu0 0
        %397 = vmatprep.subr.bf16.mxu0 0
        %398 = vmatpush1.bf16.msra.mxu0 0
        %399 = vmatprep.subr.bf16.mxu0 0
        %400 = vmatpush1.bf16.msra.mxu0 0
        %401 = vmatprep.subr.bf16.mxu0 0
        %402 = vmatpush1.bf16.msra.mxu0 0
        %403 = vmatprep.subr.bf16.mxu0 0
        %404 = vmatpush1.bf16.msra.mxu0 0
        %405 = vmatprep.subr.bf16.mxu0 0
        %406 = vmatpush1.bf16.msra.mxu0 0
        %407 = vmatprep.mubr.bf16.mxu0 0
        %408 = vmatmul.mubr.bf16.gmra.mrb[0].mxu0 %v345
        %v409 = vpop.f32.mrb[0].mxu0
        %v410 = vadd.f32 0.0, %v409
        %v411 = vpop.f32.mrb[0].mxu0
        %v412 = vadd.f32 0.0, %v411
        %v413 = vpop.f32.mrb[0].mxu0
        %v414 = vadd.f32 0.0, %v413
        %v415 = vpop.f32.mrb[0].mxu0
        %v416 = vadd.f32 0.0, %v415
        %417 = vmatprep.mubr.bf16.mxu0 0
        %418 = vmatmul.mubr.bf16.gmra.mrb[0].mxu0 %v348
        %v419 = vpop.f32.mrb[0].mxu0
        %v420 = vadd.f32 0.0, %v419
        %v421 = vpop.f32.mrb[0].mxu0
        %v422 = vadd.f32 0.0, %v421
        %v423 = vpop.f32.mrb[0].mxu0
        %v424 = vadd.f32 0.0, %v423
        %v425 = vpop.f32.mrb[0].mxu0
        %v426 = vadd.f32 0.0, %v425
        %427 = vmatprep.mubr.bf16.mxu0 0
        %428 = vmatmul.mubr.bf16.gmra.mrb[0].mxu0 %v351
        %v429 = vpop.f32.mrb[0].mxu0
        %v430 = vadd.f32 0.0, %v429
        %v431 = vpop.f32.mrb[0].mxu0
        %v432 = vadd.f32 0.0, %v431
        %v433 = vpop.f32.mrb[0].mxu0
        %v434 = vadd.f32 0.0, %v433
        %v435 = vpop.f32.mrb[0].mxu0
        %v436 = vadd.f32 0.0, %v435
        %437 = vmatprep.mubr.bf16.mxu0 0
        %438 = vmatmul.mubr.bf16.gmra.mrb[0].mxu0 %v354
        %v439 = vpop.f32.mrb[0].mxu0
        %v440 = vadd.f32 0.0, %v439
        %v441 = vpop.f32.mrb[0].mxu0
        %v442 = vadd.f32 0.0, %v441
        %v443 = vpop.f32.mrb[0].mxu0
        %v444 = vadd.f32 0.0, %v443
        %v445 = vpop.f32.mrb[0].mxu0
        %v446 = vadd.f32 0.0, %v445
        %447 = vmatprep.mubr.bf16.mxu0 0
        %448 = vmatmul.mubr.bf16.gmra.mrb[0].mxu0 %v357
        %v449 = vpop.f32.mrb[0].mxu0
        %v450 = vadd.f32 0.0, %v449
        %v451 = vpop.f32.mrb[0].mxu0
        %v452 = vadd.f32 0.0, %v451
        %v453 = vpop.f32.mrb[0].mxu0
        %v454 = vadd.f32 0.0, %v453
        %v455 = vpop.f32.mrb[0].mxu0
        %v456 = vadd.f32 0.0, %v455
        %457 = vmatprep.mubr.bf16.mxu0 0
        %458 = vmatmul.mubr.bf16.gmra.mrb[0].mxu0 %v360
        %v459 = vpop.f32.mrb[0].mxu0
        %v460 = vadd.f32 0.0, %v459
        %v461 = vpop.f32.mrb[0].mxu0
        %v462 = vadd.f32 0.0, %v461
        %v463 = vpop.f32.mrb[0].mxu0
        %v464 = vadd.f32 0.0, %v463
        %v465 = vpop.f32.mrb[0].mxu0
        %v466 = vadd.f32 0.0, %v465
        %467 = vmatprep.mubr.bf16.mxu0 0
        %468 = vmatmul.mubr.bf16.gmra.mrb[0].mxu0 %v363
        %v469 = vpop.f32.mrb[0].mxu0
        %v470 = vadd.f32 0.0, %v469
        %v471 = vpop.f32.mrb[0].mxu0
        %v472 = vadd.f32 0.0, %v471
        %v473 = vpop.f32.mrb[0].mxu0
        %v474 = vadd.f32 0.0, %v473
        %v475 = vpop.f32.mrb[0].mxu0
        %v476 = vadd.f32 0.0, %v475
        %477 = vmatprep.mubr.bf16.mxu0 0
        %478 = vmatmul.mubr.bf16.gmra.mrb[0].mxu0 %v366
        %v479 = vpop.f32.mrb[0].mxu0
        %v480 = vadd.f32 0.0, %v479
        %v481 = vpop.f32.mrb[0].mxu0
        %v482 = vadd.f32 0.0, %v481
        %v483 = vpop.f32.mrb[0].mxu0
        %v484 = vadd.f32 0.0, %v483
        %v485 = vpop.f32.mrb[0].mxu0
        %v486 = vadd.f32 0.0, %v485
        %487 = vdwg.mxu0
        %v488 = vmax.f32 %v410, 0.0
        %v489 = vmax.f32 %v412, 0.0
        %v490 = vmax.f32 %v414, 0.0
        %v491 = vmax.f32 %v416, 0.0
        %v492 = vmax.f32 %v420, 0.0
        %v493 = vmax.f32 %v422, 0.0
        %v494 = vmax.f32 %v424, 0.0
        %v495 = vmax.f32 %v426, 0.0
        %v496 = vmax.f32 %v430, 0.0
        %v497 = vmax.f32 %v432, 0.0
        %v498 = vmax.f32 %v434, 0.0
        %v499 = vmax.f32 %v436, 0.0
        %v500 = vmax.f32 %v440, 0.0
        %v501 = vmax.f32 %v442, 0.0
        %v502 = vmax.f32 %v444, 0.0
        %v503 = vmax.f32 %v446, 0.0
        %v504 = vpack.c.bf16 %v490, %v488
        %v505 = vpack.c.bf16 %v491, %v489
        %v506 = vpack.c.bf16 %v494, %v492
        %v507 = vpack.c.bf16 %v495, %v493
        %v508 = vpack.c.bf16 %v498, %v496
        %v509 = vpack.c.bf16 %v499, %v497
        %v510 = vpack.c.bf16 %v502, %v500
        %v511 = vpack.c.bf16 %v503, %v501
        %v512 = vld [vmem:[%s2] sm:$0xf]
        %v513 = vld [vmem:[%s2 + $0x4] sm:$0xf]
        %v514 = vld [vmem:[%s2 + $0x8] sm:$0xf]
        %v515 = vld [vmem:[%s2 + $0xc] sm:$0xf]
        %v516 = vld [vmem:[%s2 + $0x10] sm:$0xf]
        %v517 = vld [vmem:[%s2 + $0x14] sm:$0xf]
        %v518 = vld [vmem:[%s2 + $0x18] sm:$0xf]
        %v519 = vld [vmem:[%s2 + $0x1c] sm:$0xf]
        %v528 = vunpack.c.l.b16 %v512
        %v529 = vunpack.c.l.b16 %v513
        %v530 = vunpack.c.l.b16 %v514
        %v531 = vunpack.c.l.b16 %v515
        %v532 = vunpack.c.l.b16 %v516
        %v533 = vunpack.c.l.b16 %v517
        %v534 = vunpack.c.l.b16 %v518
        %v535 = vunpack.c.l.b16 %v519
        %v536 = vpack.c.b16 %v529, %v528
        %v537 = vpack.c.b16 %v531, %v530
        %v538 = vpack.c.b16 %v533, %v532
        %v539 = vpack.c.b16 %v535, %v534
        %vm540 = vcmask 523264
        %v542 = vsel %vm540, %v536, 0
        %v545 = vsel %vm540, %v537, 0
        %v548 = vsel %vm540, %v538, 0
        %v551 = vsel %vm540, %v539, 0
        %553 = vmatprep.subr.bf16.mxu0 %v505
        %554 = vmatpush1.bf16.msra.mxu0 %v504
        %555 = vmatprep.subr.bf16.mxu0 %v507
        %556 = vmatpush1.bf16.msra.mxu0 %v506
        %557 = vmatprep.subr.bf16.mxu0 %v509
        %558 = vmatpush1.bf16.msra.mxu0 %v508
        %559 = vmatprep.subr.bf16.mxu0 %v511
        %560 = vmatpush1.bf16.msra.mxu0 %v510
        %561 = vmatprep.subr.bf16.mxu0 0
        %562 = vmatpush1.bf16.msra.mxu0 0
        %563 = vmatprep.subr.bf16.mxu0 0
        %564 = vmatpush1.bf16.msra.mxu0 0
        %565 = vmatprep.subr.bf16.mxu0 0
        %566 = vmatpush1.bf16.msra.mxu0 0
        %567 = vmatprep.subr.bf16.mxu0 0
        %568 = vmatpush1.bf16.msra.mxu0 0
        %569 = vmatprep.subr.bf16.mxu0 0
        %570 = vmatpush1.bf16.msra.mxu0 0
        %571 = vmatprep.subr.bf16.mxu0 0
        %572 = vmatpush1.bf16.msra.mxu0 0
        %573 = vmatprep.subr.bf16.mxu0 0
        %574 = vmatpush1.bf16.msra.mxu0 0
        %575 = vmatprep.subr.bf16.mxu0 0
        %576 = vmatpush1.bf16.msra.mxu0 0
        %577 = vmatprep.subr.bf16.mxu0 0
        %578 = vmatpush1.bf16.msra.mxu0 0
        %579 = vmatprep.subr.bf16.mxu0 0
        %580 = vmatpush1.bf16.msra.mxu0 0
        %581 = vmatprep.subr.bf16.mxu0 0
        %582 = vmatpush1.bf16.msra.mxu0 0
        %583 = vmatprep.subr.bf16.mxu0 0
        %584 = vmatpush1.bf16.msra.mxu0 0
        %585 = vmatprep.mubr.bf16.mxu0 0
        %586 = vmatmul.mubr.bf16.gmra.mrb[0].mxu0 %v542
        %v587 = vpop.f32.mrb[0].mxu0
        %v588 = vadd.f32 0.0, %v587
        %v589 = vpop.f32.mrb[0].mxu0
        %v590 = vadd.f32 0.0, %v589
        %v591 = vpop.f32.mrb[0].mxu0
        %v592 = vadd.f32 0.0, %v591
        %v593 = vpop.f32.mrb[0].mxu0
        %v594 = vadd.f32 0.0, %v593
        %595 = vmatprep.mubr.bf16.mxu0 0
        %596 = vmatmul.mubr.bf16.gmra.mrb[0].mxu0 %v545
        %v597 = vpop.f32.mrb[0].mxu0
        %v598 = vadd.f32 0.0, %v597
        %v599 = vpop.f32.mrb[0].mxu0
        %v600 = vadd.f32 0.0, %v599
        %v601 = vpop.f32.mrb[0].mxu0
        %v602 = vadd.f32 0.0, %v601
        %v603 = vpop.f32.mrb[0].mxu0
        %v604 = vadd.f32 0.0, %v603
        %605 = vmatprep.mubr.bf16.mxu0 0
        %606 = vmatmul.mubr.bf16.gmra.mrb[0].mxu0 %v548
        %v607 = vpop.f32.mrb[0].mxu0
        %v608 = vadd.f32 0.0, %v607
        %v609 = vpop.f32.mrb[0].mxu0
        %v610 = vadd.f32 0.0, %v609
        %v611 = vpop.f32.mrb[0].mxu0
        %v612 = vadd.f32 0.0, %v611
        %v613 = vpop.f32.mrb[0].mxu0
        %v614 = vadd.f32 0.0, %v613
        %615 = vmatprep.mubr.bf16.mxu0 0
        %616 = vmatmul.mubr.bf16.gmra.mrb[0].mxu0 %v551
        %v617 = vpop.f32.mrb[0].mxu0
        %v618 = vadd.f32 0.0, %v617
        %v619 = vpop.f32.mrb[0].mxu0
        %v620 = vadd.f32 0.0, %v619
        %v621 = vpop.f32.mrb[0].mxu0
        %v622 = vadd.f32 0.0, %v621
        %v623 = vpop.f32.mrb[0].mxu0
        %v624 = vadd.f32 0.0, %v623
        %625 = vdwg.mxu0
        %v626 = vmax.f32 %v588, 0.0
        %v627 = vmax.f32 %v590, 0.0
        %v628 = vmax.f32 %v592, 0.0
        %v629 = vmax.f32 %v594, 0.0
        %v630 = vmax.f32 %v598, 0.0
        %v631 = vmax.f32 %v600, 0.0
        %v632 = vmax.f32 %v602, 0.0
        %v633 = vmax.f32 %v604, 0.0
        %v634 = vmax.f32 %v608, 0.0
        %v635 = vmax.f32 %v610, 0.0
        %v636 = vmax.f32 %v612, 0.0
        %v637 = vmax.f32 %v614, 0.0
        %v638 = vmax.f32 %v618, 0.0
        %v639 = vmax.f32 %v620, 0.0
        %v640 = vmax.f32 %v622, 0.0
        %v641 = vmax.f32 %v624, 0.0
        %v642 = vpack.c.bf16 %v628, %v626
        %v643 = vpack.c.bf16 %v629, %v627
        %v644 = vpack.c.bf16 %v632, %v630
        %v645 = vpack.c.bf16 %v633, %v631
        %v646 = vpack.c.bf16 %v636, %v634
        %v647 = vpack.c.bf16 %v637, %v635
        %v648 = vpack.c.bf16 %v640, %v638
        %v649 = vpack.c.bf16 %v641, %v639
        %v650 = vld [vmem:[%s3] sm:$0xf]
        %v651 = vld [vmem:[%s3 + $0x4] sm:$0xf]
        %v652 = vld [vmem:[%s3 + $0x8] sm:$0xf]
        %v653 = vld [vmem:[%s3 + $0xc] sm:$0xf]
        %v654 = vld [vmem:[%s3 + $0x10] sm:$0xf]
        %v655 = vld [vmem:[%s3 + $0x14] sm:$0xf]
        %v656 = vld [vmem:[%s3 + $0x18] sm:$0xf]
        %v657 = vld [vmem:[%s3 + $0x1c] sm:$0xf]
        %v658 = vld [vmem:[%s3 + $0x20] sm:$0x1]
        %v668 = vunpack.c.l.b16 %v650
        %v669 = vunpack.c.l.b16 %v651
        %v670 = vunpack.c.l.b16 %v652
        %v671 = vunpack.c.l.b16 %v653
        %v672 = vunpack.c.l.b16 %v654
        %v673 = vunpack.c.l.b16 %v655
        %v674 = vunpack.c.l.b16 %v656
        %v675 = vunpack.c.l.b16 %v657
        %v676 = vunpack.c.l.b16 %v658
        %v677 = vpack.c.b16 %v669, %v668
        %v678 = vpack.c.b16 %v671, %v670
        %v679 = vpack.c.b16 %v673, %v672
        %v680 = vpack.c.b16 %v675, %v674
        %v681 = vpack.c.b16 %v676, %v676
        %v683 = vsel %vm540, %v677, 0
        %v686 = vsel %vm540, %v678, 0
        %v689 = vsel %vm540, %v679, 0
        %v692 = vsel %vm540, %v680, 0
        %v695 = vsel %vm540, %v681, 0
        %697 = vmatprep.subr.bf16.mxu0 %v643
        %698 = vmatpush1.bf16.msra.mxu0 %v642
        %699 = vmatprep.subr.bf16.mxu0 %v645
        %700 = vmatpush1.bf16.msra.mxu0 %v644
        %701 = vmatprep.subr.bf16.mxu0 %v647
        %702 = vmatpush1.bf16.msra.mxu0 %v646
        %703 = vmatprep.subr.bf16.mxu0 %v649
        %704 = vmatpush1.bf16.msra.mxu0 %v648
        %705 = vmatprep.subr.bf16.mxu0 0
        %706 = vmatpush1.bf16.msra.mxu0 0
        %707 = vmatprep.subr.bf16.mxu0 0
        %708 = vmatpush1.bf16.msra.mxu0 0
        %709 = vmatprep.subr.bf16.mxu0 0
        %710 = vmatpush1.bf16.msra.mxu0 0
        %711 = vmatprep.subr.bf16.mxu0 0
        %712 = vmatpush1.bf16.msra.mxu0 0
        %713 = vmatprep.subr.bf16.mxu0 0
        %714 = vmatpush1.bf16.msra.mxu0 0
        %715 = vmatprep.subr.bf16.mxu0 0
        %716 = vmatpush1.bf16.msra.mxu0 0
        %717 = vmatprep.subr.bf16.mxu0 0
        %718 = vmatpush1.bf16.msra.mxu0 0
        %719 = vmatprep.subr.bf16.mxu0 0
        %720 = vmatpush1.bf16.msra.mxu0 0
        %721 = vmatprep.subr.bf16.mxu0 0
        %722 = vmatpush1.bf16.msra.mxu0 0
        %723 = vmatprep.subr.bf16.mxu0 0
        %724 = vmatpush1.bf16.msra.mxu0 0
        %725 = vmatprep.subr.bf16.mxu0 0
        %726 = vmatpush1.bf16.msra.mxu0 0
        %727 = vmatprep.subr.bf16.mxu0 0
        %728 = vmatpush1.bf16.msra.mxu0 0
        %729 = vmatprep.mubr.bf16.mxu0 0
        %730 = vmatmul.mubr.bf16.gmra.mrb[0].mxu0 %v683
        %v731 = vpop.f32.mrb[0].mxu0
        %v732 = vadd.f32 0.0, %v731
        %v733 = vpop.f32.mrb[0].mxu0
        %v734 = vadd.f32 0.0, %v733
        %v735 = vpop.f32.mrb[0].mxu0
        %v736 = vadd.f32 0.0, %v735
        %v737 = vpop.f32.mrb[0].mxu0
        %v738 = vadd.f32 0.0, %v737
        %739 = vmatprep.mubr.bf16.mxu0 0
        %740 = vmatmul.mubr.bf16.gmra.mrb[0].mxu0 %v686
        %v741 = vpop.f32.mrb[0].mxu0
        %v742 = vadd.f32 0.0, %v741
        %v743 = vpop.f32.mrb[0].mxu0
        %v744 = vadd.f32 0.0, %v743
        %v745 = vpop.f32.mrb[0].mxu0
        %v746 = vadd.f32 0.0, %v745
        %v747 = vpop.f32.mrb[0].mxu0
        %v748 = vadd.f32 0.0, %v747
        %749 = vmatprep.mubr.bf16.mxu0 0
        %750 = vmatmul.mubr.bf16.gmra.mrb[0].mxu0 %v689
        %v751 = vpop.f32.mrb[0].mxu0
        %v752 = vadd.f32 0.0, %v751
        %v753 = vpop.f32.mrb[0].mxu0
        %v754 = vadd.f32 0.0, %v753
        %v755 = vpop.f32.mrb[0].mxu0
        %v756 = vadd.f32 0.0, %v755
        %v757 = vpop.f32.mrb[0].mxu0
        %v758 = vadd.f32 0.0, %v757
        %759 = vmatprep.mubr.bf16.mxu0 0
        %760 = vmatmul.mubr.bf16.gmra.mrb[0].mxu0 %v692
        %v761 = vpop.f32.mrb[0].mxu0
        %v762 = vadd.f32 0.0, %v761
        %v763 = vpop.f32.mrb[0].mxu0
        %v764 = vadd.f32 0.0, %v763
        %v765 = vpop.f32.mrb[0].mxu0
        %v766 = vadd.f32 0.0, %v765
        %v767 = vpop.f32.mrb[0].mxu0
        %v768 = vadd.f32 0.0, %v767
        %769 = vmatprep.mubr.bf16.mxu0 0
        %770 = vmatmul.mubr.bf16.gmra.mrb[0].mxu0 %v695
        %v771 = vpop.f32.mrb[0].mxu0
        %v772 = vadd.f32 0.0, %v771
        %v773 = vpop.f32.mrb[0].mxu0
        %v774 = vadd.f32 0.0, %v773
        %v775 = vpop.f32.mrb[0].mxu0
        %v776 = vpop.f32.mrb[0].mxu0
        %777 = vdwg.mxu0
        %v778 = vadd.f32 %v450, %v732
        %v779 = vadd.f32 %v452, %v734
        %v780 = vadd.f32 %v454, %v736
        %v781 = vadd.f32 %v456, %v738
        %v782 = vadd.f32 %v460, %v742
        %v783 = vadd.f32 %v462, %v744
        %v784 = vadd.f32 %v464, %v746
        %v785 = vadd.f32 %v466, %v748
        %v786 = vadd.f32 %v470, %v752
        %v787 = vadd.f32 %v472, %v754
        %v788 = vadd.f32 %v474, %v756
        %v789 = vadd.f32 %v476, %v758
        %v790 = vadd.f32 %v480, %v762
        %v791 = vadd.f32 %v482, %v764
        %v792 = vadd.f32 %v484, %v766
        %v793 = vadd.f32 %v486, %v768
        %v794 = vmax.f32 %v778, 0.0
        %v795 = vmax.f32 %v779, 0.0
        %v796 = vmax.f32 %v780, 0.0
        %v797 = vmax.f32 %v781, 0.0
        %v798 = vmax.f32 %v782, 0.0
        %v799 = vmax.f32 %v783, 0.0
        %v800 = vmax.f32 %v784, 0.0
        %v801 = vmax.f32 %v785, 0.0
        %v802 = vmax.f32 %v786, 0.0
        %v803 = vmax.f32 %v787, 0.0
        %v804 = vmax.f32 %v788, 0.0
        %v805 = vmax.f32 %v789, 0.0
        %v806 = vmax.f32 %v790, 0.0
        %v807 = vmax.f32 %v791, 0.0
        %v808 = vmax.f32 %v792, 0.0
        %v809 = vmax.f32 %v793, 0.0
        %v810 = vpack.c.bf16 %v796, %v794
        %v811 = vpack.c.bf16 %v797, %v795
        %v812 = vpack.c.bf16 %v800, %v798
        %v813 = vpack.c.bf16 %v801, %v799
        %v814 = vpack.c.bf16 %v804, %v802
        %v815 = vpack.c.bf16 %v805, %v803
        %v816 = vpack.c.bf16 %v808, %v806
        %v817 = vpack.c.bf16 %v809, %v807
        %v818 = vld [vmem:[%s4] sm:$0xf]
        %v819 = vld [vmem:[%s4 + $0x4] sm:$0xf]
        %v820 = vld [vmem:[%s4 + $0x8] sm:$0xf]
        %v821 = vld [vmem:[%s4 + $0xc] sm:$0xf]
        %v822 = vld [vmem:[%s4 + $0x10] sm:$0xf]
        %v823 = vld [vmem:[%s4 + $0x14] sm:$0xf]
        %v824 = vld [vmem:[%s4 + $0x18] sm:$0xf]
        %v825 = vld [vmem:[%s4 + $0x1c] sm:$0xf]
        %v834 = vunpack.c.l.b16 %v818
        %v835 = vunpack.c.l.b16 %v819
        %v836 = vunpack.c.l.b16 %v820
        %v837 = vunpack.c.l.b16 %v821
        %v838 = vunpack.c.l.b16 %v822
        %v839 = vunpack.c.l.b16 %v823
        %v840 = vunpack.c.l.b16 %v824
        %v841 = vunpack.c.l.b16 %v825
        %v842 = vpack.c.b16 %v835, %v834
        %v843 = vpack.c.b16 %v837, %v836
        %v844 = vpack.c.b16 %v839, %v838
        %v845 = vpack.c.b16 %v841, %v840
        %v847 = vsel %vm540, %v842, 0
        %v850 = vsel %vm540, %v843, 0
        %v853 = vsel %vm540, %v844, 0
        %v856 = vsel %vm540, %v845, 0
        %858 = vmatprep.subr.bf16.mxu0 %v811
        %859 = vmatpush1.bf16.msra.mxu0 %v810
        %860 = vmatprep.subr.bf16.mxu0 %v813
        %861 = vmatpush1.bf16.msra.mxu0 %v812
        %862 = vmatprep.subr.bf16.mxu0 %v815
        %863 = vmatpush1.bf16.msra.mxu0 %v814
        %864 = vmatprep.subr.bf16.mxu0 %v817
        %865 = vmatpush1.bf16.msra.mxu0 %v816
        %866 = vmatprep.subr.bf16.mxu0 0
        %867 = vmatpush1.bf16.msra.mxu0 0
        %868 = vmatprep.subr.bf16.mxu0 0
        %869 = vmatpush1.bf16.msra.mxu0 0
        %870 = vmatprep.subr.bf16.mxu0 0
        %871 = vmatpush1.bf16.msra.mxu0 0
        %872 = vmatprep.subr.bf16.mxu0 0
        %873 = vmatpush1.bf16.msra.mxu0 0
        %874 = vmatprep.subr.bf16.mxu0 0
        %875 = vmatpush1.bf16.msra.mxu0 0
        %876 = vmatprep.subr.bf16.mxu0 0
        %877 = vmatpush1.bf16.msra.mxu0 0
        %878 = vmatprep.subr.bf16.mxu0 0
        %879 = vmatpush1.bf16.msra.mxu0 0
        %880 = vmatprep.subr.bf16.mxu0 0
        %881 = vmatpush1.bf16.msra.mxu0 0
        %882 = vmatprep.subr.bf16.mxu0 0
        %883 = vmatpush1.bf16.msra.mxu0 0
        %884 = vmatprep.subr.bf16.mxu0 0
        %885 = vmatpush1.bf16.msra.mxu0 0
        %886 = vmatprep.subr.bf16.mxu0 0
        %887 = vmatpush1.bf16.msra.mxu0 0
        %888 = vmatprep.subr.bf16.mxu0 0
        %889 = vmatpush1.bf16.msra.mxu0 0
        %890 = vmatprep.mubr.bf16.mxu0 0
        %891 = vmatmul.mubr.bf16.gmra.mrb[0].mxu0 %v847
        %v892 = vpop.f32.mrb[0].mxu0
        %v893 = vadd.f32 0.0, %v892
        %v894 = vpop.f32.mrb[0].mxu0
        %v895 = vadd.f32 0.0, %v894
        %v896 = vpop.f32.mrb[0].mxu0
        %v897 = vadd.f32 0.0, %v896
        %v898 = vpop.f32.mrb[0].mxu0
        %v899 = vadd.f32 0.0, %v898
        %900 = vmatprep.mubr.bf16.mxu0 0
        %901 = vmatmul.mubr.bf16.gmra.mrb[0].mxu0 %v850
        %v902 = vpop.f32.mrb[0].mxu0
        %v903 = vadd.f32 0.0, %v902
        %v904 = vpop.f32.mrb[0].mxu0
        %v905 = vadd.f32 0.0, %v904
        %v906 = vpop.f32.mrb[0].mxu0
        %v907 = vadd.f32 0.0, %v906
        %v908 = vpop.f32.mrb[0].mxu0
        %v909 = vadd.f32 0.0, %v908
        %910 = vmatprep.mubr.bf16.mxu0 0
        %911 = vmatmul.mubr.bf16.gmra.mrb[0].mxu0 %v853
        %v912 = vpop.f32.mrb[0].mxu0
        %v913 = vadd.f32 0.0, %v912
        %v914 = vpop.f32.mrb[0].mxu0
        %v915 = vadd.f32 0.0, %v914
        %v916 = vpop.f32.mrb[0].mxu0
        %v917 = vadd.f32 0.0, %v916
        %v918 = vpop.f32.mrb[0].mxu0
        %v919 = vadd.f32 0.0, %v918
        %920 = vmatprep.mubr.bf16.mxu0 0
        %921 = vmatmul.mubr.bf16.gmra.mrb[0].mxu0 %v856
        %v922 = vpop.f32.mrb[0].mxu0
        %v923 = vadd.f32 0.0, %v922
        %v924 = vpop.f32.mrb[0].mxu0
        %v925 = vadd.f32 0.0, %v924
        %v926 = vpop.f32.mrb[0].mxu0
        %v927 = vadd.f32 0.0, %v926
        %v928 = vpop.f32.mrb[0].mxu0
        %v929 = vadd.f32 0.0, %v928
        %930 = vdwg.mxu0
        %v931 = vmax.f32 %v893, 0.0
        %v932 = vmax.f32 %v895, 0.0
        %v933 = vmax.f32 %v897, 0.0
        %v934 = vmax.f32 %v899, 0.0
        %v935 = vmax.f32 %v903, 0.0
        %v936 = vmax.f32 %v905, 0.0
        %v937 = vmax.f32 %v907, 0.0
        %v938 = vmax.f32 %v909, 0.0
        %v939 = vmax.f32 %v913, 0.0
        %v940 = vmax.f32 %v915, 0.0
        %v941 = vmax.f32 %v917, 0.0
        %v942 = vmax.f32 %v919, 0.0
        %v943 = vmax.f32 %v923, 0.0
        %v944 = vmax.f32 %v925, 0.0
        %v945 = vmax.f32 %v927, 0.0
        %v946 = vmax.f32 %v929, 0.0
        %v947 = vpack.c.bf16 %v933, %v931
        %v948 = vpack.c.bf16 %v934, %v932
        %v949 = vpack.c.bf16 %v937, %v935
        %v950 = vpack.c.bf16 %v938, %v936
        %v951 = vpack.c.bf16 %v941, %v939
        %v952 = vpack.c.bf16 %v942, %v940
        %v953 = vpack.c.bf16 %v945, %v943
        %v954 = vpack.c.bf16 %v946, %v944
        %v955 = vld [vmem:[%s5] sm:$0xf]
        %v956 = vld [vmem:[%s5 + $0x4] sm:$0xf]
        %v957 = vld [vmem:[%s5 + $0x8] sm:$0xf]
        %v958 = vld [vmem:[%s5 + $0xc] sm:$0xf]
        %v959 = vld [vmem:[%s5 + $0x10] sm:$0xf]
        %v960 = vld [vmem:[%s5 + $0x14] sm:$0xf]
        %v961 = vld [vmem:[%s5 + $0x18] sm:$0xf]
        %v962 = vld [vmem:[%s5 + $0x1c] sm:$0xf]
        %v971 = vunpack.c.l.b16 %v955
        %v972 = vunpack.c.l.b16 %v956
        %v973 = vunpack.c.l.b16 %v957
        %v974 = vunpack.c.l.b16 %v958
        %v975 = vunpack.c.l.b16 %v959
        %v976 = vunpack.c.l.b16 %v960
        %v977 = vunpack.c.l.b16 %v961
        %v978 = vunpack.c.l.b16 %v962
        %v979 = vpack.c.b16 %v972, %v971
        %v980 = vpack.c.b16 %v974, %v973
        %v981 = vpack.c.b16 %v976, %v975
        %v982 = vpack.c.b16 %v978, %v977
        %v984 = vsel %vm540, %v979, 0
        %v987 = vsel %vm540, %v980, 0
        %v990 = vsel %vm540, %v981, 0
        %v993 = vsel %vm540, %v982, 0
        %995 = vmatprep.subr.bf16.mxu0 %v948
        %996 = vmatpush1.bf16.msra.mxu0 %v947
        %997 = vmatprep.subr.bf16.mxu0 %v950
        %998 = vmatpush1.bf16.msra.mxu0 %v949
        %999 = vmatprep.subr.bf16.mxu0 %v952
        %1000 = vmatpush1.bf16.msra.mxu0 %v951
        %1001 = vmatprep.subr.bf16.mxu0 %v954
        %1002 = vmatpush1.bf16.msra.mxu0 %v953
        %1003 = vmatprep.subr.bf16.mxu0 0
        %1004 = vmatpush1.bf16.msra.mxu0 0
        %1005 = vmatprep.subr.bf16.mxu0 0
        %1006 = vmatpush1.bf16.msra.mxu0 0
        %1007 = vmatprep.subr.bf16.mxu0 0
        %1008 = vmatpush1.bf16.msra.mxu0 0
        %1009 = vmatprep.subr.bf16.mxu0 0
        %1010 = vmatpush1.bf16.msra.mxu0 0
        %1011 = vmatprep.subr.bf16.mxu0 0
        %1012 = vmatpush1.bf16.msra.mxu0 0
        %1013 = vmatprep.subr.bf16.mxu0 0
        %1014 = vmatpush1.bf16.msra.mxu0 0
        %1015 = vmatprep.subr.bf16.mxu0 0
        %1016 = vmatpush1.bf16.msra.mxu0 0
        %1017 = vmatprep.subr.bf16.mxu0 0
        %1018 = vmatpush1.bf16.msra.mxu0 0
        %1019 = vmatprep.subr.bf16.mxu0 0
        %1020 = vmatpush1.bf16.msra.mxu0 0
        %1021 = vmatprep.subr.bf16.mxu0 0
        %1022 = vmatpush1.bf16.msra.mxu0 0
        %1023 = vmatprep.subr.bf16.mxu0 0
        %1024 = vmatpush1.bf16.msra.mxu0 0
        %1025 = vmatprep.subr.bf16.mxu0 0
        %1026 = vmatpush1.bf16.msra.mxu0 0
        %1027 = vmatprep.mubr.bf16.mxu0 0
        %1028 = vmatmul.mubr.bf16.gmra.mrb[0].mxu0 %v984
        %v1029 = vpop.f32.mrb[0].mxu0
        %v1030 = vadd.f32 0.0, %v1029
        %v1031 = vpop.f32.mrb[0].mxu0
        %v1032 = vadd.f32 0.0, %v1031
        %v1033 = vpop.f32.mrb[0].mxu0
        %v1034 = vadd.f32 0.0, %v1033
        %v1035 = vpop.f32.mrb[0].mxu0
        %v1036 = vadd.f32 0.0, %v1035
        %1037 = vmatprep.mubr.bf16.mxu0 0
        %1038 = vmatmul.mubr.bf16.gmra.mrb[0].mxu0 %v987
        %v1039 = vpop.f32.mrb[0].mxu0
        %v1040 = vadd.f32 0.0, %v1039
        %v1041 = vpop.f32.mrb[0].mxu0
        %v1042 = vadd.f32 0.0, %v1041
        %v1043 = vpop.f32.mrb[0].mxu0
        %v1044 = vadd.f32 0.0, %v1043
        %v1045 = vpop.f32.mrb[0].mxu0
        %v1046 = vadd.f32 0.0, %v1045
        %1047 = vmatprep.mubr.bf16.mxu0 0
        %1048 = vmatmul.mubr.bf16.gmra.mrb[0].mxu0 %v990
        %v1049 = vpop.f32.mrb[0].mxu0
        %v1050 = vadd.f32 0.0, %v1049
        %v1051 = vpop.f32.mrb[0].mxu0
        %v1052 = vadd.f32 0.0, %v1051
        %v1053 = vpop.f32.mrb[0].mxu0
        %v1054 = vadd.f32 0.0, %v1053
        %v1055 = vpop.f32.mrb[0].mxu0
        %v1056 = vadd.f32 0.0, %v1055
        %1057 = vmatprep.mubr.bf16.mxu0 0
        %1058 = vmatmul.mubr.bf16.gmra.mrb[0].mxu0 %v993
        %v1059 = vpop.f32.mrb[0].mxu0
        %v1060 = vadd.f32 0.0, %v1059
        %v1061 = vpop.f32.mrb[0].mxu0
        %v1062 = vadd.f32 0.0, %v1061
        %v1063 = vpop.f32.mrb[0].mxu0
        %v1064 = vadd.f32 0.0, %v1063
        %v1065 = vpop.f32.mrb[0].mxu0
        %v1066 = vadd.f32 0.0, %v1065
        %1067 = vdwg.mxu0
        %v1068 = vmax.f32 %v1030, 0.0
        %v1069 = vmax.f32 %v1032, 0.0
        %v1070 = vmax.f32 %v1034, 0.0
        %v1071 = vmax.f32 %v1036, 0.0
        %v1072 = vmax.f32 %v1040, 0.0
        %v1073 = vmax.f32 %v1042, 0.0
        %v1074 = vmax.f32 %v1044, 0.0
        %v1075 = vmax.f32 %v1046, 0.0
        %v1076 = vmax.f32 %v1050, 0.0
        %v1077 = vmax.f32 %v1052, 0.0
        %v1078 = vmax.f32 %v1054, 0.0
        %v1079 = vmax.f32 %v1056, 0.0
        %v1080 = vmax.f32 %v1060, 0.0
        %v1081 = vmax.f32 %v1062, 0.0
        %v1082 = vmax.f32 %v1064, 0.0
        %v1083 = vmax.f32 %v1066, 0.0
        %v1084 = vpack.c.bf16 %v1070, %v1068
        %v1085 = vpack.c.bf16 %v1071, %v1069
        %v1086 = vpack.c.bf16 %v1074, %v1072
        %v1087 = vpack.c.bf16 %v1075, %v1073
        %v1088 = vpack.c.bf16 %v1078, %v1076
        %v1089 = vpack.c.bf16 %v1079, %v1077
        %v1090 = vpack.c.bf16 %v1082, %v1080
        %v1091 = vpack.c.bf16 %v1083, %v1081
        %v1092 = vld [vmem:[%s6] sm:$0x3]
        %v1094 = vsel %vm540, %v1092, 0
        %1096 = vmatprep.subr.bf16.mxu0 %v1085
        %1097 = vmatpush1.bf16.msra.mxu0 %v1084
        %1098 = vmatprep.subr.bf16.mxu0 %v1087
        %1099 = vmatpush1.bf16.msra.mxu0 %v1086
        %1100 = vmatprep.subr.bf16.mxu0 %v1089
        %1101 = vmatpush1.bf16.msra.mxu0 %v1088
        %1102 = vmatprep.subr.bf16.mxu0 %v1091
        %1103 = vmatpush1.bf16.msra.mxu0 %v1090
        %1104 = vmatprep.subr.bf16.mxu0 0
        %1105 = vmatpush1.bf16.msra.mxu0 0
        %1106 = vmatprep.subr.bf16.mxu0 0
        %1107 = vmatpush1.bf16.msra.mxu0 0
        %1108 = vmatprep.subr.bf16.mxu0 0
        %1109 = vmatpush1.bf16.msra.mxu0 0
        %1110 = vmatprep.subr.bf16.mxu0 0
        %1111 = vmatpush1.bf16.msra.mxu0 0
        %1112 = vmatprep.subr.bf16.mxu0 0
        %1113 = vmatpush1.bf16.msra.mxu0 0
        %1114 = vmatprep.subr.bf16.mxu0 0
        %1115 = vmatpush1.bf16.msra.mxu0 0
        %1116 = vmatprep.subr.bf16.mxu0 0
        %1117 = vmatpush1.bf16.msra.mxu0 0
        %1118 = vmatprep.subr.bf16.mxu0 0
        %1119 = vmatpush1.bf16.msra.mxu0 0
        %1120 = vmatprep.subr.bf16.mxu0 0
        %1121 = vmatpush1.bf16.msra.mxu0 0
        %1122 = vmatprep.subr.bf16.mxu0 0
        %1123 = vmatpush1.bf16.msra.mxu0 0
        %1124 = vmatprep.subr.bf16.mxu0 0
        %1125 = vmatpush1.bf16.msra.mxu0 0
        %1126 = vmatprep.subr.bf16.mxu0 0
        %1127 = vmatpush1.bf16.msra.mxu0 0
        %1128 = vmatprep.mubr.bf16.mxu0 0
        %1129 = vmatmul.mubr.bf16.gmra.mrb[0].mxu0 %v1094
        %v1130 = vpop.f32.mrb[0].mxu0
        %v1131 = vadd.f32 0.0, %v1130
        %v1132 = vpop.f32.mrb[0].mxu0
        %v1133 = vadd.f32 0.0, %v1132
        %v1134 = vpop.f32.mrb[0].mxu0
        %v1135 = vpop.f32.mrb[0].mxu0
        %1136 = vdwg.mxu0
        %v1139 = vcombine.low %v1131, %v1133
        %1141 = vst [vmem:[%s272] sm:$0x77] %v1139
        %v1144 = vcombine.low %v772, %v774
        %v1146 = vunpack.c.l.s4 1966171168
        %v1147 = vunpack.c.0.s8 %v1146
        %v1148 = vlaneseq
        %v1149 = vshrl.u32 %v1148, 7
        %v1150 = vsub.s32 %v1147, %v1149
        %v1151 = vrot.slane %v1144, %v1150
        %v1153 = vunpack.c.l.s4 1966171168
        %v1154 = vunpack.c.0.s8 %v1153
        %v1155 = vlaneseq
        %v1156 = vshrl.u32 %v1155, 7
        %v1157 = vsub.s32 %v1154, %v1156
        %v1158 = vrot.slane %v1151, %v1157
        %v1160 = vlaneseq
        %vm1161 = vcmp.ge.s32.totalorder %v1160, 0
        %vm1162 = vcmp.lt.s32.totalorder %v1160, 256
        %vm1163 = vmand %vm1161, %vm1162
        %s1164 = scalar_lea.vmem %s272, 3 [#allocation2]
        %1165 = vst.msk [vmem:[%s1164] ss:$4 sm:$0x3] %vm1163, %v1158
        %s1166 = sand.u32 %s181, 1
        %s1167 = scalar_lea.sflag [#allocation3], %s1166
        %s1168 = sand.u32 %s181, 1
        %s1169 = smul.addr %s1168, 8
        %s1170 = scalar_lea.vmem [#allocation2], %s1169
        // Predicated region
        $region49: #{nerf_small_forward.1} parent=47 // pred_check
          %p1171 = pneg %p191
        $region50: #{nerf_small_forward.1} parent=47 // pred_check_branch
          %1173 = sbr.rel (%p1171) target = $region52
        $region51: #{nerf_small_forward.1} parent=47 // pred_region
          %s1174 = smul.u32 2, %s21
          %s1176 = ssub.s32 128, 128
          %1177 = vsyncadd %s1167, %s1176
          %s1178 = smul.addr %s1174, 64
          %s1179 = scalar_lea.hbm %s7, %s1178
          %s1181 = sshll.u32 %s1170, 4
          %s1182 = int_to_ptr.vmem [resolvable:$true] %s1181
          %1184 = dma.vmem_to_hbm [thread:$0]  %s1182, 128, %s1179, %s1167
        $region52: #{nerf_small_forward.1} parent=47 // pred_fallthru
          _
      $region48: #{nerf_small_forward.1} parent=5 // pred_fallthru
        _
      %p1185 = scmp.le.s32.totalorder 2, %s16
      // Predicated region
      $region53: #{nerf_small_forward.1} parent=5 // pred_check
        %p1186 = pneg %p1185
      $region54: #{nerf_small_forward.1} parent=5 // pred_check_branch
        %1188 = sbr.rel (%p1186) target = $region56
      $region55: #{nerf_small_forward.1} parent=5 // pred_region
        %s1189 = ssub.s32 %s16, 2
        // Predicated region
        $region57: #{nerf_small_forward.1} parent=55 // pred_check
          %p1190 = pneg %p197
        $region58: #{nerf_small_forward.1} parent=55 // pred_check_branch
          %1192 = sbr.rel (%p1190) target = $region60
        $region59: #{nerf_small_forward.1} parent=55 // pred_region
          %s1193 = sand.u32 %s182, 1
          %s1194 = scalar_lea.sflag [#allocation3], %s1193
          %s1195 = sand.u32 %s182, 1
          %s1196 = smul.addr %s1195, 8
          %s1197 = scalar_lea.vmem [#allocation2], %s1196
          %1198 = dma.done %s1194, 128
        $region60: #{nerf_small_forward.1} parent=55 // pred_fallthru
          _
      $region56: #{nerf_small_forward.1} parent=5 // pred_fallthru
        _
    $region6: #{nerf_small_forward.1} parent=1 // loop_footer
      %s20 = sadd.s32 1, %s16
    $region7: #{nerf_small_forward.1} parent=1 // loop_footer_branch
      %15 = sbr.rel target = $region3
    $region8: #{nerf_small_forward.1} parent=1 // loop_exit
      _
    %1199 = vsyncpa [#allocation3], 1
    %s1200 = scalar_lea.sflag [#allocation3], 1
    %1201 = vsyncpa %s1200, 1

</llo_original>
